<compile_context>
chip_gen: v5e
topology: v5e:2x2
jax: 0.10.0
libtpu: 0.0.40
codegen_flags: <defaults>
</compile_context>

<pallas_src>
import functools
import math

import jax
import jax.numpy as jnp
import numpy as np
from jax.experimental import pallas as pl
from jax.experimental.pallas import tpu as pltpu


# ------------------------------ helpers --------------------------------------

_SQRT_2_INV = 1.0 / math.sqrt(2.0)


def _gelu(x):
    # exact (erf) GELU, matching torch.nn.GELU default; erf/rsqrt run on the EUP slot.
    return 0.5 * x * (1.0 + jax.lax.erf(x * _SQRT_2_INV))


def _act(y, act):
    if act == "relu":
        return jnp.maximum(y, 0.0)
    if act == "gelu":
        return _gelu(y)
    return y


def _row_tile(T, target=256):
    # Large row tiles amortize the ~0.35 us/step grid overhead and fill the MXU.
    # Ragged tails (T not a multiple of TM) are handled by Pallas boundary-block
    # masking (OOB reads are per-row garbage that never gets written back), so no
    # wrapper-side jnp.concatenate padding is needed.
    if T >= target:
        return target
    return max(8, ((T + 7) // 8) * 8)


def _grid_params():
    return pltpu.CompilerParams(dimension_semantics=("parallel",))


def _ln(y, gamma, beta, eps):
    mu = jnp.mean(y, axis=-1, keepdims=True)
    var = jnp.mean((y - mu) ** 2, axis=-1, keepdims=True)
    return (y - mu) * jax.lax.rsqrt(var + eps) * gamma + beta


# ----------------------------- Pallas kernels ---------------------------------

def _ln_linear_kernel(x_ref, g_ref, bln_ref, w_ref, b_ref, o_ref, *, eps, act):
    xn = _ln(x_ref[...], g_ref[...], bln_ref[...], eps)
    y = jnp.dot(xn, w_ref[...], preferred_element_type=jnp.float32) + b_ref[...]
    o_ref[...] = _act(y, act)


def fused_ln_linear(x, ln_g, ln_b, w, b, act="none", eps=1e-5):
    """act(LayerNorm(x) @ w + b).  x:(T,Din)  w:(Din,Dout)."""
    T, Din = x.shape
    Dout = w.shape[1]
    TM = _row_tile(T)
    return pl.pallas_call(
        functools.partial(_ln_linear_kernel, eps=eps, act=act),
        out_shape=jax.ShapeDtypeStruct((T, Dout), jnp.float32),
        grid=(pl.cdiv(T, TM),),
        in_specs=[
            pl.BlockSpec((TM, Din), lambda i: (i, 0)),
            pl.BlockSpec((1, Din), lambda i: (0, 0)),
            pl.BlockSpec((1, Din), lambda i: (0, 0)),
            pl.BlockSpec((Din, Dout), lambda i: (0, 0)),
            pl.BlockSpec((1, Dout), lambda i: (0, 0)),
        ],
        out_specs=pl.BlockSpec((TM, Dout), lambda i: (i, 0)),
        compiler_params=_grid_params(),
    )(x, ln_g, ln_b, w, b)


def _mask_mlp_kernel(x_ref, w1_ref, b1_ref, w2_ref, b2_ref, w3_ref, b3_ref, o_ref):
    h = _gelu(jnp.dot(x_ref[...], w1_ref[...],
                      preferred_element_type=jnp.float32) + b1_ref[...])
    h = _gelu(jnp.dot(h, w2_ref[...],
                      preferred_element_type=jnp.float32) + b2_ref[...])
    # Final Dout=1 projection as a VPU multiply + lane reduction (avoids a lane-sparse
    # 1-column MXU matmul / masked store of a wide tile).
    o_ref[...] = jnp.sum(h * w3_ref[...], axis=-1, keepdims=True) + b3_ref[...]


def fused_mask_mlp(x, w1, b1, w2, b2, w3_row, b3):
    """Linear-GELU-Linear-GELU-Linear(->1) in one kernel.  w3_row:(1,D2), b3:(1,1)."""
    T, Din = x.shape
    D1 = w1.shape[1]
    D2 = w2.shape[1]
    TM = _row_tile(T)
    return pl.pallas_call(
        _mask_mlp_kernel,
        out_shape=jax.ShapeDtypeStruct((T, 1), jnp.float32),
        grid=(pl.cdiv(T, TM),),
        in_specs=[
            pl.BlockSpec((TM, Din), lambda i: (i, 0)),
            pl.BlockSpec((Din, D1), lambda i: (0, 0)),
            pl.BlockSpec((1, D1), lambda i: (0, 0)),
            pl.BlockSpec((D1, D2), lambda i: (0, 0)),
            pl.BlockSpec((1, D2), lambda i: (0, 0)),
            pl.BlockSpec((1, D2), lambda i: (0, 0)),
            pl.BlockSpec((1, 1), lambda i: (0, 0)),
        ],
        out_specs=pl.BlockSpec((TM, 1), lambda i: (i, 0)),
        compiler_params=_grid_params(),
    )(x, w1, b1, w2, b2, w3_row, b3)


def _add_linear_kernel(a_ref, b_ref, w_ref, bias_ref, o_ref):
    q = a_ref[...] + b_ref[...]                    # tgt + pos folded into the kernel
    o_ref[...] = jnp.dot(q, w_ref[...], preferred_element_type=jnp.float32) + bias_ref[...]


def fused_add_linear(a, b, w, bias):
    """(a + b) @ w + bias.  Used for the fused sampling-offset/attention-weight proj."""
    T, Din = a.shape
    Dout = w.shape[1]
    TM = _row_tile(T)
    return pl.pallas_call(
        _add_linear_kernel,
        out_shape=jax.ShapeDtypeStruct((T, Dout), jnp.float32),
        grid=(pl.cdiv(T, TM),),
        in_specs=[
            pl.BlockSpec((TM, Din), lambda i: (i, 0)),
            pl.BlockSpec((TM, Din), lambda i: (i, 0)),
            pl.BlockSpec((Din, Dout), lambda i: (0, 0)),
            pl.BlockSpec((1, Dout), lambda i: (0, 0)),
        ],
        out_specs=pl.BlockSpec((TM, Dout), lambda i: (i, 0)),
        compiler_params=_grid_params(),
    )(a, b, w, bias)


def _masked_linear_kernel(x_ref, m_ref, w_ref, b_ref, o_ref):
    y = jnp.dot(x_ref[...], w_ref[...], preferred_element_type=jnp.float32) + b_ref[...]
    o_ref[...] = y * m_ref[...]                    # zero out padded tokens in-kernel


def fused_masked_linear(x, m_col, w, b):
    """(x @ w + b) * m_col, with m_col:(T,1) the per-token keep mask."""
    T, Din = x.shape
    Dout = w.shape[1]
    TM = _row_tile(T)
    return pl.pallas_call(
        _masked_linear_kernel,
        out_shape=jax.ShapeDtypeStruct((T, Dout), jnp.float32),
        grid=(pl.cdiv(T, TM),),
        in_specs=[
            pl.BlockSpec((TM, Din), lambda i: (i, 0)),
            pl.BlockSpec((TM, 1), lambda i: (i, 0)),
            pl.BlockSpec((Din, Dout), lambda i: (0, 0)),
            pl.BlockSpec((1, Dout), lambda i: (0, 0)),
        ],
        out_specs=pl.BlockSpec((TM, Dout), lambda i: (i, 0)),
        compiler_params=_grid_params(),
    )(x, m_col, w, b)


def _linear_res_ln_kernel(x_ref, res_ref, w_ref, b_ref, g_ref, beta_ref, o_ref, *, eps):
    y = res_ref[...] + jnp.dot(x_ref[...], w_ref[...],
                               preferred_element_type=jnp.float32) + b_ref[...]
    o_ref[...] = _ln(y, g_ref[...], beta_ref[...], eps)


def fused_linear_residual_ln(x, res, w, b, gamma, beta, eps=1e-5):
    """LayerNorm(res + x @ w + b).  Attention output projection + residual + LN."""
    T, Din = x.shape
    Dout = w.shape[1]
    TM = _row_tile(T)
    return pl.pallas_call(
        functools.partial(_linear_res_ln_kernel, eps=eps),
        out_shape=jax.ShapeDtypeStruct((T, Dout), jnp.float32),
        grid=(pl.cdiv(T, TM),),
        in_specs=[
            pl.BlockSpec((TM, Din), lambda i: (i, 0)),
            pl.BlockSpec((TM, Dout), lambda i: (i, 0)),
            pl.BlockSpec((Din, Dout), lambda i: (0, 0)),
            pl.BlockSpec((1, Dout), lambda i: (0, 0)),
            pl.BlockSpec((1, Dout), lambda i: (0, 0)),
            pl.BlockSpec((1, Dout), lambda i: (0, 0)),
        ],
        out_specs=pl.BlockSpec((TM, Dout), lambda i: (i, 0)),
        compiler_params=_grid_params(),
    )(x, res, w, b, gamma, beta)


def _ffn_ln_kernel(x_ref, w1_ref, b1_ref, w2_ref, b2_ref, g_ref, beta_ref, o_ref, *, eps):
    x = x_ref[...]
    h = jnp.maximum(jnp.dot(x, w1_ref[...],
                            preferred_element_type=jnp.float32) + b1_ref[...], 0.0)
    y = x + jnp.dot(h, w2_ref[...], preferred_element_type=jnp.float32) + b2_ref[...]
    o_ref[...] = _ln(y, g_ref[...], beta_ref[...], eps)


def fused_ffn_ln(x, w1, b1, w2, b2, gamma, beta, eps=1e-5):
    """LayerNorm(x + relu(x @ w1 + b1) @ w2 + b2) — whole FFN block in one kernel."""
    T, C = x.shape
    F = w1.shape[1]
    TM = _row_tile(T)
    return pl.pallas_call(
        functools.partial(_ffn_ln_kernel, eps=eps),
        out_shape=jax.ShapeDtypeStruct((T, C), jnp.float32),
        grid=(pl.cdiv(T, TM),),
        in_specs=[
            pl.BlockSpec((TM, C), lambda i: (i, 0)),
            pl.BlockSpec((C, F), lambda i: (0, 0)),
            pl.BlockSpec((1, F), lambda i: (0, 0)),
            pl.BlockSpec((F, C), lambda i: (0, 0)),
            pl.BlockSpec((1, C), lambda i: (0, 0)),
            pl.BlockSpec((1, C), lambda i: (0, 0)),
            pl.BlockSpec((1, C), lambda i: (0, 0)),
        ],
        out_specs=pl.BlockSpec((TM, C), lambda i: (i, 0)),
        compiler_params=_grid_params(),
    )(x, w1, b1, w2, b2, gamma, beta)


# ----------------------------- MaskPredictor ----------------------------------

def mask_predictor_forward(p, x):
    """MaskPredictor (learnable_rate=False).  x: (B, N, C) -> (B, N, 1)."""
    B, N, C = x.shape
    hd = p["h_dim"]
    x2 = x.reshape(B * N, C)
    # layer1: LayerNorm -> Linear -> GELU fused into one Pallas kernel.
    z = fused_ln_linear(x2, p["ln_g"], p["ln_b"], p["l1"]["w"], p["l1"]["b"], act="gelu")
    z = z.reshape(B, N, hd)
    z_local, z_global = z[..., : hd // 2], z[..., hd // 2:]
    z_global = jnp.mean(z_global, axis=1, keepdims=True)      # over real tokens only
    z_global = jnp.broadcast_to(z_global, (B, N, hd // 2))
    z = jnp.concatenate([z_local, z_global], axis=-1).reshape(B * N, hd)
    # layer2: Linear-GELU-Linear-GELU-Linear(->1) fused into one Pallas kernel.
    out = fused_mask_mlp(z, p["l2a"]["w"], p["l2a"]["b"],
                         p["l2b"]["w"], p["l2b"]["b"],
                         p["l2c"]["w_row"], p["l2c"]["b"])
    return out.reshape(B, N, 1)


# ----------------------------- reference points --------------------------------

def get_reference_points(spatial_shapes, valid_ratios):
    ref_list = []
    for lvl, (H_, W_) in enumerate(spatial_shapes):
        ref_y, ref_x = jnp.meshgrid(
            jnp.linspace(0.5, H_ - 0.5, H_, dtype=jnp.float32),
            jnp.linspace(0.5, W_ - 0.5, W_, dtype=jnp.float32),
            indexing="ij")
        ref_y = ref_y.reshape(-1)[None] / (valid_ratios[:, None, lvl, 1] * H_)
        ref_x = ref_x.reshape(-1)[None] / (valid_ratios[:, None, lvl, 0] * W_)
        ref_list.append(jnp.stack((ref_x, ref_y), axis=-1))
    reference_points = jnp.concatenate(ref_list, axis=1)          # (B, N, 2)
    reference_points = reference_points[:, :, None] * valid_ratios[:, None]
    return reference_points                                       # (B, N, L, 2)


# -------------------- deformable attention bilinear core -----------------------

def ms_deform_attn_core(value, spatial_shapes, sampling_locations, attention_weights):
    # TODO(synk): data-dependent bilinear gather (F.grid_sample equivalent) stays in
    # plain JAX — a Pallas PrefetchScalarGridSpec / DMA-gather version is the next step
    # for production sizes where this dominates.
    B, Lv, nH, Dh = value.shape
    _, Lq, _, L, P, _ = sampling_locations.shape
    sizes = [h * w for h, w in spatial_shapes]
    value_list = jnp.split(value, list(np.cumsum(sizes)[:-1]), axis=1)
    per_level = []
    for lvl, (H_, W_) in enumerate(spatial_shapes):
        v = jnp.transpose(value_list[lvl], (0, 2, 1, 3))          # (B,nH,HW,Dh)
        loc = sampling_locations[:, :, :, lvl]                    # (B,Lq,nH,P,2) in [0,1]
        # grid_sample(bilinear, align_corners=False, padding_mode='zeros'):
        x = loc[..., 0] * W_ - 0.5
        y = loc[..., 1] * H_ - 0.5
        x0 = jnp.floor(x)
        y0 = jnp.floor(y)
        wx1 = x - x0
        wx0 = 1.0 - wx1
        wy1 = y - y0
        wy0 = 1.0 - wy1

        def corner(xi, yi):
            valid = (xi >= 0) & (xi <= W_ - 1) & (yi >= 0) & (yi <= H_ - 1)
            xi_c = jnp.clip(xi, 0, W_ - 1).astype(jnp.int32)
            yi_c = jnp.clip(yi, 0, H_ - 1).astype(jnp.int32)
            idx = yi_c * W_ + xi_c                                # (B,Lq,nH,P)
            idx = jnp.transpose(idx, (0, 2, 1, 3)).reshape(B, nH, Lq * P)
            idx = jnp.broadcast_to(idx[..., None], (B, nH, Lq * P, Dh))
            g = jnp.take_along_axis(v, idx, axis=2).reshape(B, nH, Lq, P, Dh)
            mask = jnp.transpose(valid, (0, 2, 1, 3))[..., None]
            return jnp.where(mask, g, 0.0)

        def w_(wa, wb):
            return jnp.transpose(wa * wb, (0, 2, 1, 3))[..., None]

        samp = (corner(x0, y0) * w_(wx0, wy0)
                + corner(x0 + 1, y0) * w_(wx1, wy0)
                + corner(x0, y0 + 1) * w_(wx0, wy1)
                + corner(x0 + 1, y0 + 1) * w_(wx1, wy1))          # (B,nH,Lq,P,Dh)
        per_level.append(samp)
    samp_all = jnp.stack(per_level, axis=3)                       # (B,nH,Lq,L,P,Dh)
    aw = jnp.transpose(attention_weights, (0, 2, 1, 3, 4))        # (B,nH,Lq,L,P)
    out = jnp.sum(samp_all * aw[..., None], axis=(3, 4))          # (B,nH,Lq,Dh)
    return jnp.transpose(out, (0, 2, 1, 3)).reshape(B, Lq, nH * Dh)


# --------------------------- encoder layer (stand-in) ---------------------------

def encoder_layer_forward(lp, cfg, src, pos, reference_points, spatial_shapes,
                          level_start_index, padding_mask, tgt):
    del level_start_index  # levels are split by spatial_shapes in the JAX core
    B, Lq, C = tgt.shape
    Lv = src.shape[1]
    H, L, P = cfg["n_heads"], cfg["n_levels"], cfg["n_points"]
    HLP = H * L * P

    # Sampling-offset + attention-weight projections fused into one wider matmul on
    # (tgt + pos); the add is folded into the kernel so `query` never hits HBM.
    w_q = jnp.concatenate([lp["samp"]["w"], lp["attn"]["w"]], axis=1)   # (C, 3*HLP)
    b_q = jnp.concatenate([lp["samp"]["b"], lp["attn"]["b"]], axis=1)
    qproj = fused_add_linear(tgt.reshape(B * Lq, C), pos.reshape(B * Lq, C), w_q, b_q)
    off = qproj[:, : 2 * HLP].reshape(B, Lq, H, L, P, 2)
    aw = qproj[:, 2 * HLP:].reshape(B, Lq, H, L * P)
    aw = jax.nn.softmax(aw, axis=-1).reshape(B, Lq, H, L, P)

    # Value projection with padding-mask zeroing fused in-kernel.
    mask_col = (1.0 - padding_mask.astype(jnp.float32)).reshape(B * Lv, 1)
    value = fused_masked_linear(src.reshape(B * Lv, C), mask_col,
                                lp["val"]["w"], lp["val"]["b"])
    value = value.reshape(B, Lv, H, C // H)

    shapes_arr = jnp.asarray(spatial_shapes, dtype=jnp.float32)          # (L,2) = (H,W)
    offset_normalizer = jnp.stack([shapes_arr[:, 1], shapes_arr[:, 0]], axis=-1)
    sampling_locations = (reference_points[:, :, None, :, None, :]
                          + off / offset_normalizer[None, None, None, :, None, :])

    attn_out = ms_deform_attn_core(value, spatial_shapes, sampling_locations, aw)

    # Output projection + residual + LayerNorm in one kernel (dropout == identity, eval).
    tgt2 = fused_linear_residual_ln(attn_out.reshape(B * Lq, C), tgt.reshape(B * Lq, C),
                                    lp["out"]["w"], lp["out"]["b"],
                                    lp["n1_g"], lp["n1_b"])
    # FFN (linear -> ReLU -> linear) + residual + LayerNorm in one kernel.
    tgt2 = fused_ffn_ln(tgt2, lp["ffn1"]["w"], lp["ffn1"]["b"],
                        lp["ffn2"]["w"], lp["ffn2"]["b"], lp["n2_g"], lp["n2_b"])
    return tgt2.reshape(B, Lq, C), sampling_locations, aw


# --------------------------- encoder forward -------------------------------------

def deformable_transformer_encoder_forward(params, cfg, src, spatial_shapes,
                                            level_start_index, valid_ratios,
                                            pos, padding_mask):
    num_layers = cfg["num_layers"]
    sparse_ratio = cfg["sparse_ratio"]

    output = src
    reference_points_orig = get_reference_points(spatial_shapes, valid_ratios)
    pos_orig = pos

    valid_token_nums = jnp.sum(~padding_mask, axis=-1).astype(jnp.int32)   # (B,)

    sampling_locations_all = []
    attn_weights_all = []

    # ---- lid == 0 sparsification (adaptive=False branch) ----
    mask_prediction = mask_predictor_forward(params["mp"], output)[..., 0]  # (B, N)
    # torch masked_fill uses the GLOBAL .min() of mask_prediction (matches reference).
    mask_prediction = jnp.where(padding_mask, jnp.min(mask_prediction), mask_prediction)
    sparse_token_nums = (valid_token_nums.astype(jnp.float32)
                         * sparse_ratio[0]).astype(jnp.int32) + 1
    # TODO(synk): topk shape is data-dependent (same as the PyTorch `int(max(...))`);
    # this keeps the outer loop eager but each Pallas call is still compiled/cached.
    topk = int(jnp.max(sparse_token_nums))
    _, topk_proposals = jax.lax.top_k(mask_prediction, topk)                # (B, topk)

    B_, N_, S_, P_ = reference_points_orig.shape
    reference_points = jnp.take_along_axis(
        reference_points_orig.reshape(B_, N_, S_ * P_),
        topk_proposals[..., None], axis=1).reshape(B_, topk, S_, P_)
    tgt = jnp.take_along_axis(output, topk_proposals[..., None], axis=1)
    pos_g = jnp.take_along_axis(pos_orig, topk_proposals[..., None], axis=1)

    # Per-batch keep mask for the variable-length scatter-back (vectorized, no Python
    # loop / no int() concretization of sparse_token_nums[i]).
    keep = jnp.arange(topk)[None, :] < sparse_token_nums[:, None]           # (B, topk)

    for lid in range(num_layers):
        tgt, sampling_locations, attn_weights = encoder_layer_forward(
            params["layers"][lid], cfg, output, pos_g, reference_points,
            spatial_shapes, level_start_index, padding_mask, tgt)
        sampling_locations_all.append(sampling_locations)
        attn_weights_all.append(attn_weights)

        # Vectorized masked scatter-back: rows past sparse_token_nums[b] rewrite the
        # original value (a no-op), so one batched scatter replaces the per-batch loop.
        orig_rows = jnp.take_along_axis(output, topk_proposals[..., None], axis=1)
        src_rows = jnp.where(keep[..., None], tgt, orig_rows)
        output = jax.vmap(lambda o, idx, s: o.at[idx].set(s))(
            output, topk_proposals, src_rows)

    sparse_token_nums_stacked = sparse_token_nums[:, None]                  # (B, 1)
    sparse_ratio_fact = sparse_token_nums_stacked / valid_token_nums[:, None]
    mask_prediction_all = mask_prediction[:, None, :]                       # (B, 1, N)
    return (output, sampling_locations_all, attn_weights_all,
            mask_prediction_all, [topk_proposals],
            sparse_token_nums_stacked, sparse_ratio_fact)


# --------------------------- deterministic params --------------------------------

def init_params(key, C, H, L, P, d_ffn, num_layers):
    kit = iter(list(jax.random.split(key, 40)))

    def lin(din, dout):
        w = jax.random.normal(next(kit), (din, dout), jnp.float32) / math.sqrt(din)
        b = 0.02 * jax.random.normal(next(kit), (1, dout), jnp.float32)
        return {"w": w, "b": b}

    l2c = lin(C // 4, 1)
    mp = {
        "h_dim": C,
        "ln_g": jnp.ones((1, C), jnp.float32),
        "ln_b": jnp.zeros((1, C), jnp.float32),
        "l1": lin(C, C),
        "l2a": lin(C, C // 2),
        "l2b": lin(C // 2, C // 4),
        # final (C//4 -> 1) projection stored as a row vector for the in-kernel
        # VPU-multiply + lane-reduction (lane-dense) formulation.
        "l2c": {"w_row": l2c["w"].T, "b": l2c["b"]},
    }
    layer = {   # _get_clones deep-copies: all layers share identical initial weights
        "samp": lin(C, H * L * P * 2),
        "attn": lin(C, H * L * P),
        "val": lin(C, C),
        "out": lin(C, C),
        "n1_g": jnp.ones((1, C), jnp.float32), "n1_b": jnp.zeros((1, C), jnp.float32),
        "ffn1": lin(C, d_ffn),
        "ffn2": lin(d_ffn, C),
        "n2_g": jnp.ones((1, C), jnp.float32), "n2_b": jnp.zeros((1, C), jnp.float32),
    }
    return {"mp": mp, "layers": [layer for _ in range(num_layers)]}


# --------------------------------- main -------------------------------------------

if __name__ == "__main__":
    key = jax.random.PRNGKey(0)
    B = 2
    d_model = 32          # also mask_predictor_dim
    n_heads = 4
    n_levels = 2
    n_points = 2
    d_ffn = 64
    num_layers = 2
    spatial_shapes = [(4, 4), (2, 2)]
    N = sum(h * w for h, w in spatial_shapes)            # 20 tokens
    level_start_index = jnp.asarray(
        [0] + list(np.cumsum([h * w for h, w in spatial_shapes])[:-1]), jnp.int32)

    k1, k2, k3, kp = jax.random.split(key, 4)
    src = jax.random.normal(k1, (B, N, d_model), jnp.float32)
    pos = jax.random.normal(k2, (B, N, d_model), jnp.float32)
    padding_mask = jnp.zeros((B, N), dtype=bool).at[1, -4:].set(True)   # True = padded
    valid_ratios = 0.75 + 0.25 * jax.random.uniform(k3, (B, n_levels, 2), jnp.float32)

    cfg = dict(n_heads=n_heads, n_levels=n_levels, n_points=n_points,
               num_layers=num_layers, sparse_ratio=[0.5])
    params = init_params(kp, d_model, n_heads, n_levels, n_points, d_ffn, num_layers)

    out = deformable_transformer_encoder_forward(
        params, cfg, src, spatial_shapes, level_start_index,
        valid_ratios, pos, padding_mask)
    jax.block_until_ready(out)
    print("KERNEL_OK")
</pallas_src>

<mosaic_0001>
module attributes {stable_mosaic.version = 11 : i64} {
  func.func @_ln_linear_kernel(%arg0: i32, %arg1: memref<40x32xf32, #tpu.memory_space<vmem>>, %arg2: memref<1x32xf32, #tpu.memory_space<vmem>>, %arg3: memref<1x32xf32, #tpu.memory_space<vmem>>, %arg4: memref<32x32xf32, #tpu.memory_space<vmem>>, %arg5: memref<1x32xf32, #tpu.memory_space<vmem>>, %arg6: memref<40x32xf32, #tpu.memory_space<vmem>>) attributes {dimension_semantics = [#tpu.dimension_semantics<parallel>], iteration_bounds = array<i64: 1>, scalar_prefetch = 0 : i64, scratch_operands = 0 : i64, tpu.core_type = #tpu.core_type<tc>, window_params = [{transform_indices = @transform_0, window_bounds = array<i64: 40, 32>}, {pipeline_mode = #tpu.pipeline_mode<synchronous>, transform_indices = @transform_1, window_bounds = array<i64: 1, 32>}, {pipeline_mode = #tpu.pipeline_mode<synchronous>, transform_indices = @transform_2, window_bounds = array<i64: 1, 32>}, {pipeline_mode = #tpu.pipeline_mode<synchronous>, transform_indices = @transform_3, window_bounds = array<i64: 32, 32>}, {pipeline_mode = #tpu.pipeline_mode<synchronous>, transform_indices = @transform_4, window_bounds = array<i64: 1, 32>}, {transform_indices = @transform_5, window_bounds = array<i64: 40, 32>}]} {
    %c0 = arith.constant 0 : index
    %c0_0 = arith.constant 0 : index
    %0 = vector.load %arg1[%c0, %c0_0] : memref<40x32xf32, #tpu.memory_space<vmem>>, vector<40x32xf32>
    %c0_1 = arith.constant 0 : index
    %c0_2 = arith.constant 0 : index
    %1 = vector.load %arg2[%c0_1, %c0_2] : memref<1x32xf32, #tpu.memory_space<vmem>>, vector<1x32xf32>
    %c0_3 = arith.constant 0 : index
    %c0_4 = arith.constant 0 : index
    %2 = vector.load %arg3[%c0_3, %c0_4] : memref<1x32xf32, #tpu.memory_space<vmem>>, vector<1x32xf32>
    %cst = arith.constant dense<0.000000e+00> : vector<40xf32>
    %3 = vector.multi_reduction <add>, %0, %cst [1] : vector<40x32xf32> to vector<40xf32>
    %4 = vector.shape_cast %3 : vector<40xf32> to vector<40x1xf32>
    %cst_5 = arith.constant 3.200000e+01 : f32
    %5 = vector.broadcast %cst_5 : f32 to vector<40x1xf32>
    %6 = arith.divf %4, %5 : vector<40x1xf32>
    %7 = vector.broadcast %6 : vector<40x1xf32> to vector<40x32xf32>
    %8 = arith.subf %0, %7 : vector<40x32xf32>
    %9 = arith.mulf %8, %8 : vector<40x32xf32>
    %cst_6 = arith.constant dense<0.000000e+00> : vector<40xf32>
    %10 = vector.multi_reduction <add>, %9, %cst_6 [1] : vector<40x32xf32> to vector<40xf32>
    %11 = vector.shape_cast %10 : vector<40xf32> to vector<40x1xf32>
    %cst_7 = arith.constant 3.200000e+01 : f32
    %12 = vector.broadcast %cst_7 : f32 to vector<40x1xf32>
    %13 = arith.divf %11, %12 : vector<40x1xf32>
    %14 = vector.broadcast %6 : vector<40x1xf32> to vector<40x32xf32>
    %15 = arith.subf %0, %14 : vector<40x32xf32>
    %cst_8 = arith.constant 9.99999974E-6 : f32
    %16 = vector.broadcast %cst_8 : f32 to vector<40x1xf32>
    %17 = arith.addf %13, %16 : vector<40x1xf32>
    %18 = math.rsqrt %17 : vector<40x1xf32>
    %19 = vector.broadcast %18 : vector<40x1xf32> to vector<40x32xf32>
    %20 = arith.mulf %15, %19 : vector<40x32xf32>
    %21 = vector.broadcast %1 : vector<1x32xf32> to vector<40x32xf32>
    %22 = arith.mulf %20, %21 : vector<40x32xf32>
    %23 = vector.broadcast %2 : vector<1x32xf32> to vector<40x32xf32>
    %24 = arith.addf %22, %23 : vector<40x32xf32>
    %c0_9 = arith.constant 0 : index
    %c0_10 = arith.constant 0 : index
    %25 = vector.load %arg4[%c0_9, %c0_10] : memref<32x32xf32, #tpu.memory_space<vmem>>, vector<32x32xf32>
    %cst_11 = arith.constant dense<0.000000e+00> : vector<40x32xf32>
    %26 = tpu.matmul %24, %25, %cst_11 {dimension_numbers = #tpu.dot_dimension_numbers<[1], [0], [0], [1], [0, 0, 1, 1], [], []>} : vector<40x32xf32>, vector<32x32xf32>, vector<40x32xf32> -> vector<40x32xf32>
    %c0_12 = arith.constant 0 : index
    %c0_13 = arith.constant 0 : index
    %27 = vector.load %arg5[%c0_12, %c0_13] : memref<1x32xf32, #tpu.memory_space<vmem>>, vector<1x32xf32>
    %28 = vector.broadcast %27 : vector<1x32xf32> to vector<40x32xf32>
    %29 = arith.addf %26, %28 : vector<40x32xf32>
    %cst_14 = arith.constant 5.000000e-01 : f32
    %30 = vector.broadcast %cst_14 : f32 to vector<40x32xf32>
    %31 = arith.mulf %30, %29 : vector<40x32xf32>
    %cst_15 = arith.constant 0.707106769 : f32
    %32 = vector.broadcast %cst_15 : f32 to vector<40x32xf32>
    %33 = arith.mulf %29, %32 : vector<40x32xf32>
    %34 = math.erf %33 : vector<40x32xf32>
    %cst_16 = arith.constant 1.000000e+00 : f32
    %35 = vector.broadcast %cst_16 : f32 to vector<40x32xf32>
    %36 = arith.addf %35, %34 : vector<40x32xf32>
    %37 = arith.mulf %31, %36 : vector<40x32xf32>
    %c0_17 = arith.constant 0 : index
    %c0_18 = arith.constant 0 : index
    %38 = vector.load %arg6[%c0_17, %c0_18] : memref<40x32xf32, #tpu.memory_space<vmem>>, vector<40x32xf32>
    tpu.vector_store %arg6[%c0_17, %c0_18], %37 {strides = array<i32>} : memref<40x32xf32, #tpu.memory_space<vmem>>, vector<40x32xf32>,
    return
  }
  func.func @transform_0(%arg0: i32) -> (i32, i32) {
    %c0_i32 = arith.constant 0 : i32
    %c0_i32_0 = arith.constant 0 : i32
    return %arg0, %c0_i32 : i32, i32
  }
  func.func @transform_1(%arg0: i32) -> (i32, i32) {
    %c0_i32 = arith.constant 0 : i32
    %c0_i32_0 = arith.constant 0 : i32
    %c0_i32_1 = arith.constant 0 : i32
    return %c0_i32, %c0_i32_0 : i32, i32
  }
  func.func @transform_2(%arg0: i32) -> (i32, i32) {
    %c0_i32 = arith.constant 0 : i32
    %c0_i32_0 = arith.constant 0 : i32
    %c0_i32_1 = arith.constant 0 : i32
    return %c0_i32, %c0_i32_0 : i32, i32
  }
  func.func @transform_3(%arg0: i32) -> (i32, i32) {
    %c0_i32 = arith.constant 0 : i32
    %c0_i32_0 = arith.constant 0 : i32
    %c0_i32_1 = arith.constant 0 : i32
    return %c0_i32, %c0_i32_0 : i32, i32
  }
  func.func @transform_4(%arg0: i32) -> (i32, i32) {
    %c0_i32 = arith.constant 0 : i32
    %c0_i32_0 = arith.constant 0 : i32
    %c0_i32_1 = arith.constant 0 : i32
    return %c0_i32, %c0_i32_0 : i32, i32
  }
  func.func @transform_5(%arg0: i32) -> (i32, i32) {
    %c0_i32 = arith.constant 0 : i32
    %c0_i32_0 = arith.constant 0 : i32
    return %arg0, %c0_i32 : i32, i32
  }
}

</mosaic_0001>

<llo_original>
// kernel: tpu_custom_call.1
$region0: #{tpu_custom_call.1}
  #allocation0 [shape = 'u32[]', space=smem, size = 0x4, offset = 0x4, fixed_abs, tag = 'smem constant byte address 0x4 - core index']
  #allocation1 [shape = 'u32[72,128]{1,0:T(1,128)}', space=vmem, size = 0x9000, scoped, tag = 'internal scratch']
  %s0 = inlined_call_operand.vmem [shape: f32[40,32], index: 0, kind: input, shape index: {}]
  %s1 = inlined_call_operand.vmem [shape: f32[1,32], index: 1, kind: input, shape index: {}]
  %s2 = inlined_call_operand.vmem [shape: f32[1,32], index: 2, kind: input, shape index: {}]
  %s3 = inlined_call_operand.vmem [shape: f32[32,32], index: 3, kind: input, shape index: {}]
  %s4 = inlined_call_operand.vmem [shape: f32[1,32], index: 4, kind: input, shape index: {}]
  %s5 = inlined_call_operand.vmem [shape: f32[40,32], index: 5, kind: output, shape index: {}]
  %s6 = sld [smem:[#allocation0]]
  $region30: #{tpu_custom_call.1} parent=0
    _
  %s8 = ssub.s32 1, %s6
  %s9 = scalar_select 0, %s8, %s6
  // Predicated region
  $region2: #{tpu_custom_call.1} parent=0 // pred_check
    _
  $region3: #{tpu_custom_call.1} parent=0 // pred_check_branch
    %11 = sbr.rel (0) target = $region5
  $region4: #{tpu_custom_call.1} parent=0 // pred_region
    _
  $region5: #{tpu_custom_call.1} parent=0 // pred_fallthru
    _
  // Predicated region
  $region6: #{tpu_custom_call.1} parent=0 // pred_check
    _
  $region7: #{tpu_custom_call.1} parent=0 // pred_check_branch
    %13 = sbr.rel (0) target = $region9
  $region8: #{tpu_custom_call.1} parent=0 // pred_region
    _
  $region9: #{tpu_custom_call.1} parent=0 // pred_fallthru
    _
  // Predicated region
  $region10: #{tpu_custom_call.1} parent=0 // pred_check
    _
  $region11: #{tpu_custom_call.1} parent=0 // pred_check_branch
    %15 = sbr.rel (0) target = $region13
  $region12: #{tpu_custom_call.1} parent=0 // pred_region
    _
  $region13: #{tpu_custom_call.1} parent=0 // pred_fallthru
    _
  // Predicated region
  $region14: #{tpu_custom_call.1} parent=0 // pred_check
    _
  $region15: #{tpu_custom_call.1} parent=0 // pred_check_branch
    %17 = sbr.rel (0) target = $region17
  $region16: #{tpu_custom_call.1} parent=0 // pred_region
    _
  $region17: #{tpu_custom_call.1} parent=0 // pred_fallthru
    _
  // Predicated region
  $region18: #{tpu_custom_call.1} parent=0 // pred_check
    _
  $region19: #{tpu_custom_call.1} parent=0 // pred_check_branch
    %19 = sbr.rel (0) target = $region21
  $region20: #{tpu_custom_call.1} parent=0 // pred_region
    _
  $region21: #{tpu_custom_call.1} parent=0 // pred_fallthru
    _
  %v20 = vld [vmem:[%s0] sm:$0xff]
  %v21 = vld [vmem:[%s0 + $0x8] sm:$0xff]
  %v22 = vld [vmem:[%s0 + $0x10] sm:$0xff]
  %v23 = vld [vmem:[%s0 + $0x18] sm:$0xff]
  %v24 = vld [vmem:[%s0 + $0x20] sm:$0xff]
  %v25 = vld [vmem:[%s1] sm:$0x1]
  %v26 = vld [vmem:[%s2] sm:$0x1]
  %vm27 = vcmask 261120
  %v28 = vsel %vm27, %v20, 0.0
  %29 = vadd.xlane.f32.xlu0 %v28
  %v30 = vpop.xlane.xlu0 %29
  %v31 = vsel %vm27, %v21, 0.0
  %32 = vadd.xlane.f32.xlu0 %v31
  %v33 = vpop.xlane.xlu0 %32
  %v34 = vsel %vm27, %v22, 0.0
  %35 = vadd.xlane.f32.xlu0 %v34
  %v36 = vpop.xlane.xlu0 %35
  %v37 = vsel %vm27, %v23, 0.0
  %38 = vadd.xlane.f32.xlu0 %v37
  %v39 = vpop.xlane.xlu0 %38
  %v40 = vsel %vm27, %v24, 0.0
  %41 = vadd.xlane.f32.xlu0 %v40
  %v42 = vpop.xlane.xlu0 %41
  %v43 = vrcp.pop 32.0
  %v44 = vmul.f32 32.0, %v43
  %v45 = vsub.f32 1.0, %v44
  %v46 = vmul.f32 %v43, %v45
  %v47 = vadd.f32 %v43, %v46
  %vm48 = vweird.f32 %v43
  %v49 = vsel %vm48, %v43, %v47
  %v50 = vmul.f32 %v30, %v49
  %v51 = vmul.f32 %v33, %v49
  %v52 = vmul.f32 %v36, %v49
  %v53 = vmul.f32 %v39, %v49
  %v54 = vmul.f32 %v42, %v49
  %v55 = vsub.f32 %v20, %v50
  %v56 = vsub.f32 %v21, %v51
  %v57 = vsub.f32 %v22, %v52
  %v58 = vsub.f32 %v23, %v53
  %v59 = vsub.f32 %v24, %v54
  %v60 = vmul.f32 %v55, %v55
  %v61 = vmul.f32 %v56, %v56
  %v62 = vmul.f32 %v57, %v57
  %v63 = vmul.f32 %v58, %v58
  %v64 = vmul.f32 %v59, %v59
  %v65 = vsel %vm27, %v60, 0.0
  %66 = vadd.xlane.f32.xlu0 %v65
  %v67 = vpop.xlane.xlu0 %66
  %v68 = vsel %vm27, %v61, 0.0
  %69 = vadd.xlane.f32.xlu0 %v68
  %v70 = vpop.xlane.xlu0 %69
  %v71 = vsel %vm27, %v62, 0.0
  %72 = vadd.xlane.f32.xlu0 %v71
  %v73 = vpop.xlane.xlu0 %72
  %v74 = vsel %vm27, %v63, 0.0
  %75 = vadd.xlane.f32.xlu0 %v74
  %v76 = vpop.xlane.xlu0 %75
  %v77 = vsel %vm27, %v64, 0.0
  %78 = vadd.xlane.f32.xlu0 %v77
  %v79 = vpop.xlane.xlu0 %78
  %v80 = vmul.f32 %v67, %v49
  %v81 = vmul.f32 %v70, %v49
  %v82 = vmul.f32 %v73, %v49
  %v83 = vmul.f32 %v76, %v49
  %v84 = vmul.f32 %v79, %v49
  %v85 = vadd.f32 %v80, 1e-05
  %v86 = vadd.f32 %v81, 1e-05
  %v87 = vadd.f32 %v82, 1e-05
  %v88 = vadd.f32 %v83, 1e-05
  %v89 = vadd.f32 %v84, 1e-05
  %v90 = vrsqrt.pop %v85
  %v91 = vmul.f32 %v90, %v85
  %v92 = vmul.f32 %v91, %v90
  %v93 = vmul.f32 0.5, %v92
  %v94 = vsub.f32 1.5, %v93
  %v95 = vmul.f32 %v90, %v94
  %vm96 = vweird.f32 %v85
  %vm97 = vweird.f32 %v90
  %vm98 = vmor %vm96, %vm97
  %v99 = vsel %vm98, %v90, %v95
  %v100 = vrsqrt.pop %v86
  %v101 = vmul.f32 %v100, %v86
  %v102 = vmul.f32 %v101, %v100
  %v103 = vmul.f32 0.5, %v102
  %v104 = vsub.f32 1.5, %v103
  %v105 = vmul.f32 %v100, %v104
  %vm106 = vweird.f32 %v86
  %vm107 = vweird.f32 %v100
  %vm108 = vmor %vm106, %vm107
  %v109 = vsel %vm108, %v100, %v105
  %v110 = vrsqrt.pop %v87
  %v111 = vmul.f32 %v110, %v87
  %v112 = vmul.f32 %v111, %v110
  %v113 = vmul.f32 0.5, %v112
  %v114 = vsub.f32 1.5, %v113
  %v115 = vmul.f32 %v110, %v114
  %vm116 = vweird.f32 %v87
  %vm117 = vweird.f32 %v110
  %vm118 = vmor %vm116, %vm117
  %v119 = vsel %vm118, %v110, %v115
  %v120 = vrsqrt.pop %v88
  %v121 = vmul.f32 %v120, %v88
  %v122 = vmul.f32 %v121, %v120
  %v123 = vmul.f32 0.5, %v122
  %v124 = vsub.f32 1.5, %v123
  %v125 = vmul.f32 %v120, %v124
  %vm126 = vweird.f32 %v88
  %vm127 = vweird.f32 %v120
  %vm128 = vmor %vm126, %vm127
  %v129 = vsel %vm128, %v120, %v125
  %v130 = vrsqrt.pop %v89
  %v131 = vmul.f32 %v130, %v89
  %v132 = vmul.f32 %v131, %v130
  %v133 = vmul.f32 0.5, %v132
  %v134 = vsub.f32 1.5, %v133
  %v135 = vmul.f32 %v130, %v134
  %vm136 = vweird.f32 %v89
  %vm137 = vweird.f32 %v130
  %vm138 = vmor %vm136, %vm137
  %v139 = vsel %vm138, %v130, %v135
  %v140 = vmul.f32 %v55, %v99
  %v141 = vmul.f32 %v56, %v109
  %v142 = vmul.f32 %v57, %v119
  %v143 = vmul.f32 %v58, %v129
  %v144 = vmul.f32 %v59, %v139
  %v146 = vperm.slane %v25, 0
  %v148 = vmul.f32 %v140, %v146
  %v149 = vmul.f32 %v141, %v146
  %v150 = vmul.f32 %v142, %v146
  %v151 = vmul.f32 %v143, %v146
  %v152 = vmul.f32 %v144, %v146
  %v154 = vperm.slane %v26, 0
  %v156 = vadd.f32 %v148, %v154
  %v157 = vadd.f32 %v149, %v154
  %v158 = vadd.f32 %v150, %v154
  %v159 = vadd.f32 %v151, %v154
  %v160 = vadd.f32 %v152, %v154
  %v161 = vld [vmem:[%s3] sm:$0xff]
  %v162 = vld [vmem:[%s3 + $0x8] sm:$0xff]
  %v163 = vld [vmem:[%s3 + $0x10] sm:$0xff]
  %v164 = vld [vmem:[%s3 + $0x18] sm:$0xff]
  %v165 = vld [vmem:[%s4] sm:$0x1]
  %v167 = vperm.slane %v165, 0
  %v170 = vsel %vm27, %v156, 0
  %v173 = vsel %vm27, %v157, 0
  %v176 = vsel %vm27, %v158, 0
  %v179 = vsel %vm27, %v159, 0
  %v182 = vsel %vm27, %v160, 0
  %184 = vmatpush.msra.mxu0 0.0
  %185 = vmatpush.msra.mxu0 0.0
  %186 = vmatpush.msra.mxu0 0.0
  %187 = vmatpush.msra.mxu0 0.0
  %188 = vmatpush.msra.mxu0 0.0
  %189 = vmatpush.msra.mxu0 0.0
  %190 = vmatpush.msra.mxu0 0.0
  %191 = vmatpush.msra.mxu0 0.0
  %192 = vmatpush.msra.mxu0 0.0
  %193 = vmatpush.msra.mxu0 0.0
  %194 = vmatpush.msra.mxu0 0.0
  %195 = vmatpush.msra.mxu0 0.0
  %196 = vmatpush.msra.mxu0 %v164
  %197 = vmatpush.msra.mxu0 %v163
  %198 = vmatpush.msra.mxu0 %v162
  %199 = vmatpush.msra.mxu0 %v161
  %200 = vmatmul.f32.gmra.mxu0 %v170
  %v201 = vpop.f32.mrf.mxu0
  %v202 = vadd.f32 %v167, %v201
  %203 = vmatmul.f32.gmra.mxu0 %v173
  %v204 = vpop.f32.mrf.mxu0
  %v205 = vadd.f32 %v167, %v204
  %206 = vmatmul.f32.gmra.mxu0 %v176
  %v207 = vpop.f32.mrf.mxu0
  %v208 = vadd.f32 %v167, %v207
  %209 = vmatmul.f32.gmra.mxu0 %v179
  %v210 = vpop.f32.mrf.mxu0
  %v211 = vadd.f32 %v167, %v210
  %212 = vmatmul.f32.gmra.mxu0 %v182
  %v213 = vpop.f32.mrf.mxu0
  %v214 = vadd.f32 %v167, %v213
  %215 = vdwg.mxu0
  %v216 = vmul.f32 %v202, 0.5
  %v217 = vmul.f32 %v205, 0.5
  %v218 = vmul.f32 %v208, 0.5
  %v219 = vmul.f32 %v211, 0.5
  %v220 = vmul.f32 %v214, 0.5
  %v221 = vmul.f32 %v202, 0.70710677
  %v222 = vmul.f32 %v205, 0.70710677
  %v223 = vmul.f32 %v208, 0.70710677
  %v224 = vmul.f32 %v211, 0.70710677
  %v225 = vmul.f32 %v214, 0.70710677
  %v226 = vmul.f32 %v221, %v221
  %v227 = vmin.f32 16.0, %v226
  %v228 = vmul.f32 %v227, 2.1237322e-06
  %v229 = vadd.f32 %v228, 0.00028619796
  %v230 = vmul.f32 %v227, %v229
  %v231 = vadd.f32 %v230, 0.0036580483
  %v232 = vmul.f32 %v227, %v231
  %v233 = vadd.f32 %v232, 0.05243302
  %v234 = vmul.f32 %v227, %v233
  %v235 = vadd.f32 %v234, 0.18741608
  %v236 = vmul.f32 %v227, %v235
  %v237 = vadd.f32 %v236, 1.1283791
  %v238 = vmul.f32 %v221, %v237
  %v239 = vmul.f32 %v227, 3.8918573e-05
  %v240 = vadd.f32 %v239, 0.001143296
  %v241 = vmul.f32 %v227, %v240
  %v242 = vadd.f32 %v241, 0.014752088
  %v243 = vmul.f32 %v227, %v242
  %v244 = vadd.f32 %v243, 0.112945676
  %v245 = vmul.f32 %v227, %v244
  %v246 = vadd.f32 %v245, 0.4994258
  %v247 = vmul.f32 %v227, %v246
  %v248 = vadd.f32 %v247, 1.0
  %v249 = vrcp.pop %v248
  %v250 = vmul.f32 %v248, %v249
  %v251 = vsub.f32 1.0, %v250
  %v252 = vmul.f32 %v249, %v251
  %v253 = vadd.f32 %v249, %v252
  %vm254 = vweird.f32 %v248
  %vm255 = vweird.f32 %v249
  %vm256 = vmor %vm254, %vm255
  %v257 = vsel %vm256, %v249, %v253
  %v258 = vand.u32 2147483647, %v248
  %vm259 = vcmp.eq.f32.partialorder %v258, 8.507059e+37
  %v260 = vand.u32 %v248, 2147483648
  %v261 = vor.u32 1.1754944e-38, %v260
  %v262 = vsel %vm259, %v261, %v257
  %v263 = vmul.f32 %v238, %v262
  %v264 = vmin.f32 %v263, 1.0
  %v265 = vmax.f32 %v264, -1.0
  %v266 = vmul.f32 %v222, %v222
  %v267 = vmin.f32 16.0, %v266
  %v268 = vmul.f32 %v267, 2.1237322e-06
  %v269 = vadd.f32 %v268, 0.00028619796
  %v270 = vmul.f32 %v267, %v269
  %v271 = vadd.f32 %v270, 0.0036580483
  %v272 = vmul.f32 %v267, %v271
  %v273 = vadd.f32 %v272, 0.05243302
  %v274 = vmul.f32 %v267, %v273
  %v275 = vadd.f32 %v274, 0.18741608
  %v276 = vmul.f32 %v267, %v275
  %v277 = vadd.f32 %v276, 1.1283791
  %v278 = vmul.f32 %v222, %v277
  %v279 = vmul.f32 %v267, 3.8918573e-05
  %v280 = vadd.f32 %v279, 0.001143296
  %v281 = vmul.f32 %v267, %v280
  %v282 = vadd.f32 %v281, 0.014752088
  %v283 = vmul.f32 %v267, %v282
  %v284 = vadd.f32 %v283, 0.112945676
  %v285 = vmul.f32 %v267, %v284
  %v286 = vadd.f32 %v285, 0.4994258
  %v287 = vmul.f32 %v267, %v286
  %v288 = vadd.f32 %v287, 1.0
  %v289 = vrcp.pop %v288
  %v290 = vmul.f32 %v288, %v289
  %v291 = vsub.f32 1.0, %v290
  %v292 = vmul.f32 %v289, %v291
  %v293 = vadd.f32 %v289, %v292
  %vm294 = vweird.f32 %v288
  %vm295 = vweird.f32 %v289
  %vm296 = vmor %vm294, %vm295
  %v297 = vsel %vm296, %v289, %v293
  %v298 = vand.u32 2147483647, %v288
  %vm299 = vcmp.eq.f32.partialorder %v298, 8.507059e+37
  %v300 = vand.u32 %v288, 2147483648
  %v301 = vor.u32 1.1754944e-38, %v300
  %v302 = vsel %vm299, %v301, %v297
  %v303 = vmul.f32 %v278, %v302
  %v304 = vmin.f32 %v303, 1.0
  %v305 = vmax.f32 %v304, -1.0
  %v306 = vmul.f32 %v223, %v223
  %v307 = vmin.f32 16.0, %v306
  %v308 = vmul.f32 %v307, 2.1237322e-06
  %v309 = vadd.f32 %v308, 0.00028619796
  %v310 = vmul.f32 %v307, %v309
  %v311 = vadd.f32 %v310, 0.0036580483
  %v312 = vmul.f32 %v307, %v311
  %v313 = vadd.f32 %v312, 0.05243302
  %v314 = vmul.f32 %v307, %v313
  %v315 = vadd.f32 %v314, 0.18741608
  %v316 = vmul.f32 %v307, %v315
  %v317 = vadd.f32 %v316, 1.1283791
  %v318 = vmul.f32 %v223, %v317
  %v319 = vmul.f32 %v307, 3.8918573e-05
  %v320 = vadd.f32 %v319, 0.001143296
  %v321 = vmul.f32 %v307, %v320
  %v322 = vadd.f32 %v321, 0.014752088
  %v323 = vmul.f32 %v307, %v322
  %v324 = vadd.f32 %v323, 0.112945676
  %v325 = vmul.f32 %v307, %v324
  %v326 = vadd.f32 %v325, 0.4994258
  %v327 = vmul.f32 %v307, %v326
  %v328 = vadd.f32 %v327, 1.0
  %v329 = vrcp.pop %v328
  %v330 = vmul.f32 %v328, %v329
  %v331 = vsub.f32 1.0, %v330
  %v332 = vmul.f32 %v329, %v331
  %v333 = vadd.f32 %v329, %v332
  %vm334 = vweird.f32 %v328
  %vm335 = vweird.f32 %v329
  %vm336 = vmor %vm334, %vm335
  %v337 = vsel %vm336, %v329, %v333
  %v338 = vand.u32 2147483647, %v328
  %vm339 = vcmp.eq.f32.partialorder %v338, 8.507059e+37
  %v340 = vand.u32 %v328, 2147483648
  %v341 = vor.u32 1.1754944e-38, %v340
  %v342 = vsel %vm339, %v341, %v337
  %v343 = vmul.f32 %v318, %v342
  %v344 = vmin.f32 %v343, 1.0
  %v345 = vmax.f32 %v344, -1.0
  %v346 = vmul.f32 %v224, %v224
  %v347 = vmin.f32 16.0, %v346
  %v348 = vmul.f32 %v347, 2.1237322e-06
  %v349 = vadd.f32 %v348, 0.00028619796
  %v350 = vmul.f32 %v347, %v349
  %v351 = vadd.f32 %v350, 0.0036580483
  %v352 = vmul.f32 %v347, %v351
  %v353 = vadd.f32 %v352, 0.05243302
  %v354 = vmul.f32 %v347, %v353
  %v355 = vadd.f32 %v354, 0.18741608
  %v356 = vmul.f32 %v347, %v355
  %v357 = vadd.f32 %v356, 1.1283791
  %v358 = vmul.f32 %v224, %v357
  %v359 = vmul.f32 %v347, 3.8918573e-05
  %v360 = vadd.f32 %v359, 0.001143296
  %v361 = vmul.f32 %v347, %v360
  %v362 = vadd.f32 %v361, 0.014752088
  %v363 = vmul.f32 %v347, %v362
  %v364 = vadd.f32 %v363, 0.112945676
  %v365 = vmul.f32 %v347, %v364
  %v366 = vadd.f32 %v365, 0.4994258
  %v367 = vmul.f32 %v347, %v366
  %v368 = vadd.f32 %v367, 1.0
  %v369 = vrcp.pop %v368
  %v370 = vmul.f32 %v368, %v369
  %v371 = vsub.f32 1.0, %v370
  %v372 = vmul.f32 %v369, %v371
  %v373 = vadd.f32 %v369, %v372
  %vm374 = vweird.f32 %v368
  %vm375 = vweird.f32 %v369
  %vm376 = vmor %vm374, %vm375
  %v377 = vsel %vm376, %v369, %v373
  %v378 = vand.u32 2147483647, %v368
  %vm379 = vcmp.eq.f32.partialorder %v378, 8.507059e+37
  %v380 = vand.u32 %v368, 2147483648
  %v381 = vor.u32 1.1754944e-38, %v380
  %v382 = vsel %vm379, %v381, %v377
  %v383 = vmul.f32 %v358, %v382
  %v384 = vmin.f32 %v383, 1.0
  %v385 = vmax.f32 %v384, -1.0
  %v386 = vmul.f32 %v225, %v225
  %v387 = vmin.f32 16.0, %v386
  %v388 = vmul.f32 %v387, 2.1237322e-06
  %v389 = vadd.f32 %v388, 0.00028619796
  %v390 = vmul.f32 %v387, %v389
  %v391 = vadd.f32 %v390, 0.0036580483
  %v392 = vmul.f32 %v387, %v391
  %v393 = vadd.f32 %v392, 0.05243302
  %v394 = vmul.f32 %v387, %v393
  %v395 = vadd.f32 %v394, 0.18741608
  %v396 = vmul.f32 %v387, %v395
  %v397 = vadd.f32 %v396, 1.1283791
  %v398 = vmul.f32 %v225, %v397
  %v399 = vmul.f32 %v387, 3.8918573e-05
  %v400 = vadd.f32 %v399, 0.001143296
  %v401 = vmul.f32 %v387, %v400
  %v402 = vadd.f32 %v401, 0.014752088
  %v403 = vmul.f32 %v387, %v402
  %v404 = vadd.f32 %v403, 0.112945676
  %v405 = vmul.f32 %v387, %v404
  %v406 = vadd.f32 %v405, 0.4994258
  %v407 = vmul.f32 %v387, %v406
  %v408 = vadd.f32 %v407, 1.0
  %v409 = vrcp.pop %v408
  %v410 = vmul.f32 %v408, %v409
  %v411 = vsub.f32 1.0, %v410
  %v412 = vmul.f32 %v409, %v411
  %v413 = vadd.f32 %v409, %v412
  %vm414 = vweird.f32 %v408
  %vm415 = vweird.f32 %v409
  %vm416 = vmor %vm414, %vm415
  %v417 = vsel %vm416, %v409, %v413
  %v418 = vand.u32 2147483647, %v408
  %vm419 = vcmp.eq.f32.partialorder %v418, 8.507059e+37
  %v420 = vand.u32 %v408, 2147483648
  %v421 = vor.u32 1.1754944e-38, %v420
  %v422 = vsel %vm419, %v421, %v417
  %v423 = vmul.f32 %v398, %v422
  %v424 = vmin.f32 %v423, 1.0
  %v425 = vmax.f32 %v424, -1.0
  %v426 = vadd.f32 %v265, 1.0
  %v427 = vadd.f32 %v305, 1.0
  %v428 = vadd.f32 %v345, 1.0
  %v429 = vadd.f32 %v385, 1.0
  %v430 = vadd.f32 %v425, 1.0
  %v431 = vmul.f32 %v216, %v426
  %v432 = vmul.f32 %v217, %v427
  %v433 = vmul.f32 %v218, %v428
  %v434 = vmul.f32 %v219, %v429
  %v435 = vmul.f32 %v220, %v430
  %436 = vst.msk [vmem:[%s5] sm:$0xff] %vm27, %v431
  %437 = vst.msk [vmem:[%s5 + $0x8] sm:$0xff] %vm27, %v432
  %438 = vst.msk [vmem:[%s5 + $0x10] sm:$0xff] %vm27, %v433
  %439 = vst.msk [vmem:[%s5 + $0x18] sm:$0xff] %vm27, %v434
  %440 = vst.msk [vmem:[%s5 + $0x20] sm:$0xff] %vm27, %v435
  // Predicated region
  $region22: #{tpu_custom_call.1} parent=0 // pred_check
    _
  $region23: #{tpu_custom_call.1} parent=0 // pred_check_branch
    %442 = sbr.rel (0) target = $region25
  $region24: #{tpu_custom_call.1} parent=0 // pred_region
    _
  $region25: #{tpu_custom_call.1} parent=0 // pred_fallthru
    _
  // Predicated region
  $region26: #{tpu_custom_call.1} parent=0 // pred_check
    _
  $region27: #{tpu_custom_call.1} parent=0 // pred_check_branch
    %444 = sbr.rel (0) target = $region29
  $region28: #{tpu_custom_call.1} parent=0 // pred_region
    _
  $region29: #{tpu_custom_call.1} parent=0 // pred_fallthru
    _

</llo_original>
